<compile_context>
chip_gen: v6e
topology: v6e:2x2x1
jax: 0.10.0
libtpu: 0.0.40
codegen_flags: <defaults>
</compile_context>

<pallas_src>
import math
from functools import partial

import jax
import jax.numpy as jnp
from jax.experimental import pallas as pl
from jax.experimental.pallas import tpu as pltpu

LANE = 128
FUSED_ADJ_BYTES_LIMIT = 24 << 20   # bf16 adjacency budget for the single-block path


def _round_up(x, m):
    return ((x + m - 1) // m) * m


# --------------------------- fused single-block path ----------------------- #
def _fused_gcn_kernel(*refs, num_layers):
    """Whole GCN stack in one invocation. All big operands arrive in bf16."""
    adj_ref, x_ref = refs[0], refs[1]
    w_refs = [refs[2 + 2 * i] for i in range(num_layers)]
    b_refs = [refs[3 + 2 * i] for i in range(num_layers)]
    o_ref = refs[2 + 2 * num_layers]        # final logits (padded, f32)
    embs_ref = refs[3 + 2 * num_layers]     # second-to-last activations (padded, f32)

    adj = adj_ref[...]                      # bf16, loaded from VMEM exactly once
    h = x_ref[...]                          # bf16 activation carry
    for i in range(num_layers):
        # Feature transform (small) then neighborhood aggregation (dominant),
        # both on the MXU with bf16 operands and f32 accumulation.
        xw = jnp.dot(h, w_refs[i][...], preferred_element_type=jnp.float32)
        agg = jnp.dot(adj, xw.astype(jnp.bfloat16),
                      preferred_element_type=jnp.float32)
        out = agg + b_refs[i][...]          # f32 epilogue (VPU filler under MXU)
        if i < num_layers - 1:
            out = jnp.maximum(out, 0.0)     # ReLU on all but the last layer
        if i == num_layers - 2:
            embs_ref[...] = out.astype(embs_ref.dtype)   # == x_list[-2] (post-ReLU)
        if i < num_layers - 1:
            h = out.astype(jnp.bfloat16)    # keep the carry in bf16
        else:
            o_ref[...] = out.astype(o_ref.dtype)


def fused_gcn_stack(adj_bf, x_bf, weights_bf, biases_f32, num_layers, dims_pad):
    """One grid-less pallas_call for the whole stack (everything resident in VMEM)."""
    n_pad = adj_bf.shape[0]
    c_pad = dims_pad[-1]
    h_pad = dims_pad[-2]

    inputs = [adj_bf, x_bf]
    for w, b in zip(weights_bf, biases_f32):
        inputs += [w, b]

    vmem_spec = pl.BlockSpec(memory_space=pltpu.MemorySpace.VMEM)
    in_specs = [vmem_spec] * len(inputs)

    in_bytes = sum(int(a.size) * a.dtype.itemsize for a in inputs)
    out_bytes = n_pad * (c_pad + h_pad) * 4
    max_d = max(dims_pad)
    scratch_bytes = 8 * n_pad * max_d * 4          # generous allowance for temporaries
    vmem_limit = min(max(_round_up(in_bytes + out_bytes + scratch_bytes, 1 << 20),
                         16 << 20), 48 << 20)

    flops = 0
    for i in range(num_layers):
        flops += 2 * n_pad * dims_pad[i] * dims_pad[i + 1]      # H @ W
        flops += 2 * n_pad * n_pad * dims_pad[i + 1]            # A_hat @ XW
    cost = pl.CostEstimate(flops=flops, transcendentals=0,
                           bytes_accessed=in_bytes + out_bytes)

    return pl.pallas_call(
        partial(_fused_gcn_kernel, num_layers=num_layers),
        out_shape=(
            jax.ShapeDtypeStruct((n_pad, c_pad), jnp.float32),
            jax.ShapeDtypeStruct((n_pad, h_pad), jnp.float32),
        ),
        in_specs=in_specs,
        out_specs=(vmem_spec, vmem_spec),
        compiler_params=pltpu.CompilerParams(vmem_limit_bytes=vmem_limit),
        cost_estimate=cost,
    )(*inputs)


# ------------------------ row-streamed large-N fallback --------------------- #
def _feat_transform_kernel(h_ref, w_ref, o_ref):
    o_ref[...] = jnp.dot(h_ref[...], w_ref[...],
                         preferred_element_type=jnp.float32).astype(o_ref.dtype)


def _feature_transform(h_bf, w_bf, tm):
    """XW = H @ W, row-tiled; output bf16 (kept resident by the aggregation kernel)."""
    n_pad, in_pad = h_bf.shape
    out_pad = w_bf.shape[1]
    return pl.pallas_call(
        _feat_transform_kernel,
        out_shape=jax.ShapeDtypeStruct((n_pad, out_pad), jnp.bfloat16),
        grid=(n_pad // tm,),
        in_specs=[pl.BlockSpec((tm, in_pad), lambda i: (i, 0)),
                  pl.BlockSpec((in_pad, out_pad), lambda i: (0, 0))],
        out_specs=pl.BlockSpec((tm, out_pad), lambda i: (i, 0)),
        compiler_params=pltpu.CompilerParams(dimension_semantics=("parallel",)),
    )(h_bf, w_bf)


def _agg_kernel(adj_ref, xw_ref, b_ref, o_ref, *, apply_relu):
    agg = jnp.dot(adj_ref[...], xw_ref[...], preferred_element_type=jnp.float32)
    out = agg + b_ref[...]
    if apply_relu:
        out = jnp.maximum(out, 0.0)
    o_ref[...] = out.astype(o_ref.dtype)


def _aggregate(adj_bf, xw_bf, b_f32, *, apply_relu, out_dtype, tm):
    """out = A_hat @ XW + b (+ReLU), streaming (tm, n_pad) bf16 row tiles of A_hat."""
    n_pad = adj_bf.shape[0]
    out_pad = xw_bf.shape[1]
    out_itemsize = jnp.dtype(out_dtype).itemsize
    need = (2 * tm * n_pad * 2            # adj row tiles, double-buffered
            + 2 * n_pad * out_pad * 2     # resident XW
            + 2 * tm * out_pad * out_itemsize
            + 2 * out_pad * 4
            + (4 << 20))
    vmem_limit = min(max(_round_up(need, 1 << 20), 16 << 20), 48 << 20)
    return pl.pallas_call(
        partial(_agg_kernel, apply_relu=apply_relu),
        out_shape=jax.ShapeDtypeStruct((n_pad, out_pad), out_dtype),
        grid=(n_pad // tm,),
        in_specs=[pl.BlockSpec((tm, n_pad), lambda i: (i, 0)),
                  pl.BlockSpec((n_pad, out_pad), lambda i: (0, 0)),
                  pl.BlockSpec((1, out_pad), lambda i: (0, 0))],
        out_specs=pl.BlockSpec((tm, out_pad), lambda i: (i, 0)),
        compiler_params=pltpu.CompilerParams(
            dimension_semantics=("parallel",),
            vmem_limit_bytes=vmem_limit),
    )(adj_bf, xw_bf, b_f32)


def row_tiled_gcn_stack(adj_bf, x_bf, weights_bf, biases_f32, num_layers):
    n_pad = adj_bf.shape[0]
    tm = 512 if n_pad % 512 == 0 else (256 if n_pad % 256 == 0 else 128)
    h = x_bf
    embs = None
    for i in range(num_layers):
        xw = _feature_transform(h, weights_bf[i], tm)
        last = (i == num_layers - 1)
        out = _aggregate(adj_bf, xw, biases_f32[i],
                         apply_relu=not last,
                         out_dtype=jnp.float32 if last else jnp.bfloat16,
                         tm=tm)
        if i == num_layers - 2:
            embs = out
        h = out
    return h, embs.astype(jnp.float32)


# --------------------------------- JAX glue -------------------------------- #
def build_normalized_adj_padded(edge_index, n_nodes, n_pad):
    """Dense A_hat = D_in^{-1/2} A^T D_out^{-1/2} (DGL copy_src+sum, norm='both'),
    built directly at (n_pad, n_pad) and emitted in bf16 (one XLA pass)."""
    del n_nodes  # padded rows/cols stay exactly zero
    src, dst = edge_index[0], edge_index[1]
    # adj[v, u] = multiplicity of edge u -> v  (row = destination)
    adj = jnp.zeros((n_pad, n_pad), jnp.float32).at[dst, src].add(1.0)
    out_deg = jnp.maximum(adj.sum(axis=0), 1.0)   # edges leaving u (clamp(min=1))
    in_deg = jnp.maximum(adj.sum(axis=1), 1.0)    # edges entering v
    a_hat = (in_deg ** -0.5)[:, None] * adj * (out_deg ** -0.5)[None, :]
    return a_hat.astype(jnp.bfloat16)


def xavier_uniform(key, fan_in, fan_out):
    bound = math.sqrt(6.0 / (fan_in + fan_out))
    return jax.random.uniform(key, (fan_in, fan_out), jnp.float32, -bound, bound)


class TricksCombPallas:
    """TricksComb with type_trick=[], whetherHasSE=[F,F,F], no norm layers, eval mode."""

    def __init__(self, key, num_feats, dim_hidden, num_classes, num_layers):
        assert num_layers >= 2
        # GCN stack dims: feats -> hidden -> ... -> hidden -> classes
        dims = [num_feats] + [dim_hidden] * (num_layers - 1) + [num_classes]
        dims_pad = [_round_up(d, LANE) for d in dims]
        self.dims, self.dims_pad = dims, dims_pad
        self.num_layers = num_layers

        self.weights, self.biases = [], []        # original f32 params (reference)
        self.weights_bf, self.biases_p = [], []   # lane-padded bf16 weights / f32 biases
        for i in range(num_layers):
            key, wk = jax.random.split(key)
            w = xavier_uniform(wk, dims[i], dims[i + 1])
            b = jnp.zeros((dims[i + 1],), jnp.float32)
            self.weights.append(w)
            self.biases.append(b)
            wp = jnp.zeros((dims_pad[i], dims_pad[i + 1]), jnp.float32)
            wp = wp.at[:dims[i], :dims[i + 1]].set(w)
            self.weights_bf.append(wp.astype(jnp.bfloat16))
            bp = jnp.zeros((1, dims_pad[i + 1]), jnp.float32)
            bp = bp.at[0, :dims[i + 1]].set(b)
            self.biases_p.append(bp)
        # TODO(synk): layers_MLP (Linear) and norm-layer params exist in __init__ but are
        # never used in forward when has_residual_MLP=False / no norm, so not materialized.

    def forward(self, x, edge_index, n_nodes, force_path=None):
        n_pad = _round_up(n_nodes, LANE)
        adj_bf = build_normalized_adj_padded(edge_index, n_nodes, n_pad)
        x_bf = jnp.zeros((n_pad, self.dims_pad[0]), jnp.bfloat16)
        x_bf = x_bf.at[:n_nodes, :self.dims[0]].set(x.astype(jnp.bfloat16))

        adj_bytes = n_pad * n_pad * 2
        use_fused = adj_bytes <= FUSED_ADJ_BYTES_LIMIT
        if force_path == "fused":
            use_fused = True
        elif force_path == "tiled":
            use_fused = False

        if use_fused:
            logits_p, embs_p = fused_gcn_stack(
                adj_bf, x_bf, self.weights_bf, self.biases_p,
                self.num_layers, self.dims_pad)
        else:
            logits_p, embs_p = row_tiled_gcn_stack(
                adj_bf, x_bf, self.weights_bf, self.biases_p, self.num_layers)

        self.embs = embs_p[:n_nodes, :self.dims[-2]]
        se_reg_all = None
        return logits_p[:n_nodes, :self.dims[-1]], se_reg_all


# --------------------------------- reference -------------------------------- #
def reference_forward(model, x, edge_index, n_nodes):
    src, dst = edge_index[0], edge_index[1]
    adj = jnp.zeros((n_nodes, n_nodes), jnp.float32).at[dst, src].add(1.0)
    out_deg = jnp.maximum(adj.sum(axis=0), 1.0)
    in_deg = jnp.maximum(adj.sum(axis=1), 1.0)
    a_hat = (in_deg ** -0.5)[:, None] * adj * (out_deg ** -0.5)[None, :]
    h = x
    for i in range(model.num_layers):
        h = a_hat @ (h @ model.weights[i]) + model.biases[i]
        if i < model.num_layers - 1:
            h = jnp.maximum(h, 0.0)
    return h


if __name__ == "__main__":
    key = jax.random.PRNGKey(0)
    N_NODES, NUM_FEATS, DIM_HIDDEN, NUM_CLASSES, NUM_LAYERS = 16, 32, 32, 8, 3
    N_EDGES = 48

    key, kx, ks, kd, kp = jax.random.split(key, 5)
    x = jax.random.normal(kx, (N_NODES, NUM_FEATS), jnp.float32)
    src = jax.random.randint(ks, (N_EDGES,), 0, N_NODES)
    dst = jax.random.randint(kd, (N_EDGES,), 0, N_NODES)
    edge_index = jnp.stack([src, dst], axis=0)   # (2, E), like PyG edge_index

    model = TricksCombPallas(kp, NUM_FEATS, DIM_HIDDEN, NUM_CLASSES, NUM_LAYERS)
    ref = reference_forward(model, x, edge_index, N_NODES)

    # Fused single-block path (shapes small enough for whole-graph VMEM residency).
    out_fused, se_reg_all = model.forward(x, edge_index, N_NODES, force_path="fused")
    out_fused = jax.block_until_ready(out_fused)
    assert out_fused.shape == (N_NODES, NUM_CLASSES)
    assert se_reg_all is None
    assert model.embs.shape == (N_NODES, DIM_HIDDEN)
    assert jnp.allclose(out_fused, ref, rtol=2e-2, atol=2e-2)

    # Row-streamed fallback path (used automatically once A_hat exceeds the VMEM budget).
    out_tiled, _ = model.forward(x, edge_index, N_NODES, force_path="tiled")
    out_tiled = jax.block_until_ready(out_tiled)
    assert out_tiled.shape == (N_NODES, NUM_CLASSES)
    assert model.embs.shape == (N_NODES, DIM_HIDDEN)
    assert jnp.allclose(out_tiled, ref, rtol=2e-2, atol=2e-2)

    print("KERNEL_OK")
</pallas_src>

<mosaic_0001>
module attributes {stable_mosaic.version = 11 : i64} {
  func.func @_fused_gcn_kernel(%arg0: memref<128x128xbf16, #tpu.memory_space<vmem>>, %arg1: memref<128x128xbf16, #tpu.memory_space<vmem>>, %arg2: memref<128x128xbf16, #tpu.memory_space<vmem>>, %arg3: memref<1x128xf32, #tpu.memory_space<vmem>>, %arg4: memref<128x128xbf16, #tpu.memory_space<vmem>>, %arg5: memref<1x128xf32, #tpu.memory_space<vmem>>, %arg6: memref<128x128xbf16, #tpu.memory_space<vmem>>, %arg7: memref<1x128xf32, #tpu.memory_space<vmem>>, %arg8: memref<128x128xf32, #tpu.memory_space<vmem>>, %arg9: memref<128x128xf32, #tpu.memory_space<vmem>>) attributes {dimension_semantics = [], scalar_prefetch = 0 : i64, scratch_operands = 0 : i64, tpu.core_type = #tpu.core_type<tc>} {
    %c0 = arith.constant 0 : index
    %c0_0 = arith.constant 0 : index
    %0 = vector.load %arg0[%c0, %c0_0] : memref<128x128xbf16, #tpu.memory_space<vmem>>, vector<128x128xbf16>
    %c0_1 = arith.constant 0 : index
    %c0_2 = arith.constant 0 : index
    %1 = vector.load %arg1[%c0_1, %c0_2] : memref<128x128xbf16, #tpu.memory_space<vmem>>, vector<128x128xbf16>
    %c0_3 = arith.constant 0 : index
    %c0_4 = arith.constant 0 : index
    %2 = vector.load %arg2[%c0_3, %c0_4] : memref<128x128xbf16, #tpu.memory_space<vmem>>, vector<128x128xbf16>
    %cst = arith.constant dense<0.000000e+00> : vector<128x128xf32>
    %3 = tpu.matmul %1, %2, %cst {dimension_numbers = #tpu.dot_dimension_numbers<[1], [0], [0], [1], [0, 0, 1, 1], [], []>} : vector<128x128xbf16>, vector<128x128xbf16>, vector<128x128xf32> -> vector<128x128xf32>
    %4 = arith.truncf %3 : vector<128x128xf32> to vector<128x128xbf16>
    %cst_5 = arith.constant dense<0.000000e+00> : vector<128x128xf32>
    %5 = tpu.matmul %0, %4, %cst_5 {dimension_numbers = #tpu.dot_dimension_numbers<[1], [0], [0], [1], [0, 0, 1, 1], [], []>} : vector<128x128xbf16>, vector<128x128xbf16>, vector<128x128xf32> -> vector<128x128xf32>
    %c0_6 = arith.constant 0 : index
    %c0_7 = arith.constant 0 : index
    %6 = vector.load %arg3[%c0_6, %c0_7] : memref<1x128xf32, #tpu.memory_space<vmem>>, vector<1x128xf32>
    %7 = vector.broadcast %6 : vector<1x128xf32> to vector<128x128xf32>
    %8 = arith.addf %5, %7 : vector<128x128xf32>
    %cst_8 = arith.constant 0.000000e+00 : f32
    %9 = vector.broadcast %cst_8 : f32 to vector<128x128xf32>
    %10 = arith.maximumf %8, %9 : vector<128x128xf32>
    %11 = arith.truncf %10 : vector<128x128xf32> to vector<128x128xbf16>
    %c0_9 = arith.constant 0 : index
    %c0_10 = arith.constant 0 : index
    %12 = vector.load %arg4[%c0_9, %c0_10] : memref<128x128xbf16, #tpu.memory_space<vmem>>, vector<128x128xbf16>
    %cst_11 = arith.constant dense<0.000000e+00> : vector<128x128xf32>
    %13 = tpu.matmul %11, %12, %cst_11 {dimension_numbers = #tpu.dot_dimension_numbers<[1], [0], [0], [1], [0, 0, 1, 1], [], []>} : vector<128x128xbf16>, vector<128x128xbf16>, vector<128x128xf32> -> vector<128x128xf32>
    %14 = arith.truncf %13 : vector<128x128xf32> to vector<128x128xbf16>
    %cst_12 = arith.constant dense<0.000000e+00> : vector<128x128xf32>
    %15 = tpu.matmul %0, %14, %cst_12 {dimension_numbers = #tpu.dot_dimension_numbers<[1], [0], [0], [1], [0, 0, 1, 1], [], []>} : vector<128x128xbf16>, vector<128x128xbf16>, vector<128x128xf32> -> vector<128x128xf32>
    %c0_13 = arith.constant 0 : index
    %c0_14 = arith.constant 0 : index
    %16 = vector.load %arg5[%c0_13, %c0_14] : memref<1x128xf32, #tpu.memory_space<vmem>>, vector<1x128xf32>
    %17 = vector.broadcast %16 : vector<1x128xf32> to vector<128x128xf32>
    %18 = arith.addf %15, %17 : vector<128x128xf32>
    %cst_15 = arith.constant 0.000000e+00 : f32
    %19 = vector.broadcast %cst_15 : f32 to vector<128x128xf32>
    %20 = arith.maximumf %18, %19 : vector<128x128xf32>
    %c0_16 = arith.constant 0 : index
    %c0_17 = arith.constant 0 : index
    %21 = vector.load %arg9[%c0_16, %c0_17] : memref<128x128xf32, #tpu.memory_space<vmem>>, vector<128x128xf32>
    tpu.vector_store %arg9[%c0_16, %c0_17], %20 {strides = array<i32>} : memref<128x128xf32, #tpu.memory_space<vmem>>, vector<128x128xf32>,
    %22 = arith.truncf %20 : vector<128x128xf32> to vector<128x128xbf16>
    %c0_18 = arith.constant 0 : index
    %c0_19 = arith.constant 0 : index
    %23 = vector.load %arg6[%c0_18, %c0_19] : memref<128x128xbf16, #tpu.memory_space<vmem>>, vector<128x128xbf16>
    %cst_20 = arith.constant dense<0.000000e+00> : vector<128x128xf32>
    %24 = tpu.matmul %22, %23, %cst_20 {dimension_numbers = #tpu.dot_dimension_numbers<[1], [0], [0], [1], [0, 0, 1, 1], [], []>} : vector<128x128xbf16>, vector<128x128xbf16>, vector<128x128xf32> -> vector<128x128xf32>
    %25 = arith.truncf %24 : vector<128x128xf32> to vector<128x128xbf16>
    %cst_21 = arith.constant dense<0.000000e+00> : vector<128x128xf32>
    %26 = tpu.matmul %0, %25, %cst_21 {dimension_numbers = #tpu.dot_dimension_numbers<[1], [0], [0], [1], [0, 0, 1, 1], [], []>} : vector<128x128xbf16>, vector<128x128xbf16>, vector<128x128xf32> -> vector<128x128xf32>
    %c0_22 = arith.constant 0 : index
    %c0_23 = arith.constant 0 : index
    %27 = vector.load %arg7[%c0_22, %c0_23] : memref<1x128xf32, #tpu.memory_space<vmem>>, vector<1x128xf32>
    %28 = vector.broadcast %27 : vector<1x128xf32> to vector<128x128xf32>
    %29 = arith.addf %26, %28 : vector<128x128xf32>
    %c0_24 = arith.constant 0 : index
    %c0_25 = arith.constant 0 : index
    %30 = vector.load %arg8[%c0_24, %c0_25] : memref<128x128xf32, #tpu.memory_space<vmem>>, vector<128x128xf32>
    tpu.vector_store %arg8[%c0_24, %c0_25], %29 {strides = array<i32>} : memref<128x128xf32, #tpu.memory_space<vmem>>, vector<128x128xf32>,
    return
  }
}

</mosaic_0001>

<llo_original>
// kernel: tpu_custom_call.1
$region0: #{tpu_custom_call.1}
  #allocation0 [shape = 'u32[]', space=smem, size = 0x4, offset = 0x4, fixed_abs, tag = 'smem constant byte address 0x4 - core index']
  #allocation1 [shape = 'u32[144,128]{1,0:T(1,128)}', space=vmem, size = 0x12000, scoped, tag = 'internal scratch']
  %s0 = inlined_call_operand.hbm [shape: bf16[128,128], index: 0, kind: input, shape index: {}]
  %s1 = inlined_call_operand.hbm [shape: bf16[128,128], index: 1, kind: input, shape index: {}]
  %s2 = inlined_call_operand.hbm [shape: bf16[128,128], index: 2, kind: input, shape index: {}]
  %s3 = inlined_call_operand.vmem [shape: f32[1,128], index: 3, kind: input, shape index: {}]
  %s4 = inlined_call_operand.hbm [shape: bf16[128,128], index: 4, kind: input, shape index: {}]
  %s5 = inlined_call_operand.vmem [shape: f32[1,128], index: 5, kind: input, shape index: {}]
  %s6 = inlined_call_operand.hbm [shape: bf16[128,128], index: 6, kind: input, shape index: {}]
  %s7 = inlined_call_operand.vmem [shape: f32[1,128], index: 7, kind: input, shape index: {}]
  %s8 = inlined_call_operand.hbm [shape: f32[128,128], index: 8, kind: output, shape index: {0}]
  %s9 = inlined_call_operand.hbm [shape: f32[128,128], index: 9, kind: output, shape index: {1}]
  %10 = xla_tuple %s8, %s9
  %s11 = sld [smem:[#allocation0]]
  $region70: #{tpu_custom_call.1} parent=0
    _
  %s13 = ssub.s32 1, %s11
  %s14 = scalar_select 0, %s13, %s11
  $region1: #{tpu_custom_call.1} parent=0
    #allocation2 [shape = 'u8[32768]{0}', space=vmem, size = 0x8000, scoped, tag = 'input window, operand 0, single buffered']
    #allocation3 [shape = 's32[1]{0}', space=sflag, size = 0x4, scoped, tag = 'scoped memory for tpu_custom_call.1']
    #allocation4 [shape = 's32[1]{0}', space=sflag, size = 0x4, scoped, tag = 'scoped memory for tpu_custom_call.1']
    #allocation5 [shape = 'u8[32768]{0}', space=vmem, size = 0x8000, scoped, tag = 'input window, operand 1, single buffered']
    #allocation6 [shape = 's32[1]{0}', space=sflag, size = 0x4, scoped, tag = 'scoped memory for tpu_custom_call.1']
    #allocation7 [shape = 'u8[32768]{0}', space=vmem, size = 0x8000, scoped, tag = 'input window, operand 2, single buffered']
    #allocation8 [shape = 'u8[32768]{0}', space=vmem, size = 0x8000, scoped, tag = 'input window, operand 4, single buffered']
    #allocation9 [shape = 's32[1]{0}', space=sflag, size = 0x4, scoped, tag = 'scoped memory for tpu_custom_call.1']
    #allocation10 [shape = 'u8[32768]{0}', space=vmem, size = 0x8000, scoped, tag = 'input window, operand 6, single buffered']
    #allocation11 [shape = 'u8[65536]{0}', space=vmem, size = 0x10000, scoped, tag = 'output window, operand 0, single buffered']
    #allocation12 [shape = 'u8[65536]{0}', space=vmem, size = 0x10000, scoped, tag = 'output window, operand 1, single buffered']
    #allocation13 [shape = 's32[1]{0}', space=sflag, size = 0x4, scoped, tag = 'scoped memory for tpu_custom_call.1']
    %15 = vsyncpa [#allocation3], 0
    %16 = vsyncpa [#allocation6], 0
    %17 = vsyncpa [#allocation9], 0
    %18 = vsyncpa [#allocation4], 0
    %19 = vsyncpa [#allocation13], 0
    // Predicated region
    $region2: #{tpu_custom_call.1} parent=1 // pred_check
      _
    $region3: #{tpu_custom_call.1} parent=1 // pred_check_branch
      %21 = sbr.rel (0) target = $region5
    $region4: #{tpu_custom_call.1} parent=1 // pred_region
      %s23 = ssub.s32 1024, 1024
      %24 = vsyncadd [#allocation3], %s23
      %s25 = sshll.u32 [#allocation2], 4
      %s26 = int_to_ptr.vmem [resolvable:$true] %s25
      %31 = dma.hbm_to_vmem [thread:$0]  %s0, 1024, %s26, [#allocation3], 64, 64, 4
    $region5: #{tpu_custom_call.1} parent=1 // pred_fallthru
      _
    // Predicated region
    $region6: #{tpu_custom_call.1} parent=1 // pred_check
      _
    $region7: #{tpu_custom_call.1} parent=1 // pred_check_branch
      %33 = sbr.rel (0) target = $region9
    $region8: #{tpu_custom_call.1} parent=1 // pred_region
      %s35 = ssub.s32 1024, 1024
      %36 = vsyncadd [#allocation6], %s35
      %s37 = sshll.u32 [#allocation5], 4
      %s38 = int_to_ptr.vmem [resolvable:$true] %s37
      %43 = dma.hbm_to_vmem [thread:$0]  %s1, 1024, %s38, [#allocation6], 64, 64, 4
    $region9: #{tpu_custom_call.1} parent=1 // pred_fallthru
      _
    // Predicated region
    $region10: #{tpu_custom_call.1} parent=1 // pred_check
      _
    $region11: #{tpu_custom_call.1} parent=1 // pred_check_branch
      %45 = sbr.rel (0) target = $region13
    $region12: #{tpu_custom_call.1} parent=1 // pred_region
      %s47 = ssub.s32 1024, 1024
      %48 = vsyncadd [#allocation6], %s47
      %s49 = sshll.u32 [#allocation7], 4
      %s50 = int_to_ptr.vmem [resolvable:$true] %s49
      %55 = dma.hbm_to_vmem [thread:$0]  %s2, 1024, %s50, [#allocation6], 64, 64, 4
    $region13: #{tpu_custom_call.1} parent=1 // pred_fallthru
      _
    // Predicated region
    $region14: #{tpu_custom_call.1} parent=1 // pred_check
      _
    $region15: #{tpu_custom_call.1} parent=1 // pred_check_branch
      %57 = sbr.rel (0) target = $region17
    $region16: #{tpu_custom_call.1} parent=1 // pred_region
      _
    $region17: #{tpu_custom_call.1} parent=1 // pred_fallthru
      _
    // Predicated region
    $region18: #{tpu_custom_call.1} parent=1 // pred_check
      _
    $region19: #{tpu_custom_call.1} parent=1 // pred_check_branch
      %59 = sbr.rel (0) target = $region21
    $region20: #{tpu_custom_call.1} parent=1 // pred_region
      %s61 = ssub.s32 1024, 1024
      %62 = vsyncadd [#allocation9], %s61
      %s63 = sshll.u32 [#allocation8], 4
      %s64 = int_to_ptr.vmem [resolvable:$true] %s63
      %69 = dma.hbm_to_vmem [thread:$0]  %s4, 1024, %s64, [#allocation9], 64, 64, 4
    $region21: #{tpu_custom_call.1} parent=1 // pred_fallthru
      _
    // Predicated region
    $region22: #{tpu_custom_call.1} parent=1 // pred_check
      _
    $region23: #{tpu_custom_call.1} parent=1 // pred_check_branch
      %71 = sbr.rel (0) target = $region25
    $region24: #{tpu_custom_call.1} parent=1 // pred_region
      _
    $region25: #{tpu_custom_call.1} parent=1 // pred_fallthru
      _
    // Predicated region
    $region26: #{tpu_custom_call.1} parent=1 // pred_check
      _
    $region27: #{tpu_custom_call.1} parent=1 // pred_check_branch
      %73 = sbr.rel (0) target = $region29
    $region28: #{tpu_custom_call.1} parent=1 // pred_region
      %s75 = ssub.s32 1024, 1024
      %76 = vsyncadd [#allocation9], %s75
      %s77 = sshll.u32 [#allocation10], 4
      %s78 = int_to_ptr.vmem [resolvable:$true] %s77
      %83 = dma.hbm_to_vmem [thread:$0]  %s6, 1024, %s78, [#allocation9], 64, 64, 4
    $region29: #{tpu_custom_call.1} parent=1 // pred_fallthru
      _
    // Predicated region
    $region30: #{tpu_custom_call.1} parent=1 // pred_check
      _
    $region31: #{tpu_custom_call.1} parent=1 // pred_check_branch
      %85 = sbr.rel (0) target = $region33
    $region32: #{tpu_custom_call.1} parent=1 // pred_region
      _
    $region33: #{tpu_custom_call.1} parent=1 // pred_fallthru
      _
    // Predicated region
    $region34: #{tpu_custom_call.1} parent=1 // pred_check
      _
    $region35: #{tpu_custom_call.1} parent=1 // pred_check_branch
      %87 = sbr.rel (0) target = $region37
    $region36: #{tpu_custom_call.1} parent=1 // pred_region
      %88 = dma.done [#allocation3], 1024
    $region37: #{tpu_custom_call.1} parent=1 // pred_fallthru
      _
    // Predicated region
    $region38: #{tpu_custom_call.1} parent=1 // pred_check
      _
    $region39: #{tpu_custom_call.1} parent=1 // pred_check_branch
      %90 = sbr.rel (0) target = $region41
    $region40: #{tpu_custom_call.1} parent=1 // pred_region
      %91 = dma.done [#allocation6], 1024
    $region41: #{tpu_custom_call.1} parent=1 // pred_fallthru
      _
    // Predicated region
    $region42: #{tpu_custom_call.1} parent=1 // pred_check
      _
    $region43: #{tpu_custom_call.1} parent=1 // pred_check_branch
      %93 = sbr.rel (0) target = $region45
    $region44: #{tpu_custom_call.1} parent=1 // pred_region
      %94 = dma.done [#allocation6], 1024
    $region45: #{tpu_custom_call.1} parent=1 // pred_fallthru
      _
    // Predicated region
    $region46: #{tpu_custom_call.1} parent=1 // pred_check
      _
    $region47: #{tpu_custom_call.1} parent=1 // pred_check_branch
      %96 = sbr.rel (0) target = $region49
    $region48: #{tpu_custom_call.1} parent=1 // pred_region
      %97 = dma.done [#allocation9], 1024
    $region49: #{tpu_custom_call.1} parent=1 // pred_fallthru
      _
    // Predicated region
    $region50: #{tpu_custom_call.1} parent=1 // pred_check
      _
    $region51: #{tpu_custom_call.1} parent=1 // pred_check_branch
      %99 = sbr.rel (0) target = $region53
    $region52: #{tpu_custom_call.1} parent=1 // pred_region
      %100 = dma.done [#allocation9], 1024
    $region53: #{tpu_custom_call.1} parent=1 // pred_fallthru
      _
    %v102 = vld [vmem:[#allocation2] sm:$0xf]
    %v103 = vld [vmem:[#allocation2 + $0x4] sm:$0xf]
    %v104 = vld [vmem:[#allocation2 + $0x8] sm:$0xf]
    %v105 = vld [vmem:[#allocation2 + $0xc] sm:$0xf]
    %v106 = vld [vmem:[#allocation2 + $0x10] sm:$0xf]
    %v107 = vld [vmem:[#allocation2 + $0x14] sm:$0xf]
    %v108 = vld [vmem:[#allocation2 + $0x18] sm:$0xf]
    %v109 = vld [vmem:[#allocation2 + $0x1c] sm:$0xf]
    %v110 = vld [vmem:[#allocation2 + $0x20] sm:$0xf]
    %v111 = vld [vmem:[#allocation2 + $0x24] sm:$0xf]
    %v112 = vld [vmem:[#allocation2 + $0x28] sm:$0xf]
    %v113 = vld [vmem:[#allocation2 + $0x2c] sm:$0xf]
    %v114 = vld [vmem:[#allocation2 + $0x30] sm:$0xf]
    %v115 = vld [vmem:[#allocation2 + $0x34] sm:$0xf]
    %v116 = vld [vmem:[#allocation2 + $0x38] sm:$0xf]
    %v117 = vld [vmem:[#allocation2 + $0x3c] sm:$0xf]
    %v118 = vld [vmem:[#allocation5] sm:$0xf]
    %v119 = vld [vmem:[#allocation5 + $0x4] sm:$0xf]
    %v120 = vld [vmem:[#allocation5 + $0x8] sm:$0xf]
    %v121 = vld [vmem:[#allocation5 + $0xc] sm:$0xf]
    %v122 = vld [vmem:[#allocation5 + $0x10] sm:$0xf]
    %v123 = vld [vmem:[#allocation5 + $0x14] sm:$0xf]
    %v124 = vld [vmem:[#allocation5 + $0x18] sm:$0xf]
    %v125 = vld [vmem:[#allocation5 + $0x1c] sm:$0xf]
    %v126 = vld [vmem:[#allocation5 + $0x20] sm:$0xf]
    %v127 = vld [vmem:[#allocation5 + $0x24] sm:$0xf]
    %v128 = vld [vmem:[#allocation5 + $0x28] sm:$0xf]
    %v129 = vld [vmem:[#allocation5 + $0x2c] sm:$0xf]
    %v130 = vld [vmem:[#allocation5 + $0x30] sm:$0xf]
    %v131 = vld [vmem:[#allocation5 + $0x34] sm:$0xf]
    %v132 = vld [vmem:[#allocation5 + $0x38] sm:$0xf]
    %v133 = vld [vmem:[#allocation5 + $0x3c] sm:$0xf]
    %v134 = vld [vmem:[#allocation7] sm:$0xf]
    %v135 = vld [vmem:[#allocation7 + $0x4] sm:$0xf]
    %v136 = vld [vmem:[#allocation7 + $0x8] sm:$0xf]
    %v137 = vld [vmem:[#allocation7 + $0xc] sm:$0xf]
    %v138 = vld [vmem:[#allocation7 + $0x10] sm:$0xf]
    %v139 = vld [vmem:[#allocation7 + $0x14] sm:$0xf]
    %v140 = vld [vmem:[#allocation7 + $0x18] sm:$0xf]
    %v141 = vld [vmem:[#allocation7 + $0x1c] sm:$0xf]
    %v142 = vld [vmem:[#allocation7 + $0x20] sm:$0xf]
    %v143 = vld [vmem:[#allocation7 + $0x24] sm:$0xf]
    %v144 = vld [vmem:[#allocation7 + $0x28] sm:$0xf]
    %v145 = vld [vmem:[#allocation7 + $0x2c] sm:$0xf]
    %v146 = vld [vmem:[#allocation7 + $0x30] sm:$0xf]
    %v147 = vld [vmem:[#allocation7 + $0x34] sm:$0xf]
    %v148 = vld [vmem:[#allocation7 + $0x38] sm:$0xf]
    %v149 = vld [vmem:[#allocation7 + $0x3c] sm:$0xf]
    %v166 = vunpack.c.l.b16 %v118
    %v167 = vunpack.c.l.b16 %v119
    %v168 = vunpack.c.l.b16 %v120
    %v169 = vunpack.c.l.b16 %v121
    %v170 = vunpack.c.l.b16 %v122
    %v171 = vunpack.c.l.b16 %v123
    %v172 = vunpack.c.l.b16 %v124
    %v173 = vunpack.c.l.b16 %v125
    %v174 = vunpack.c.l.b16 %v126
    %v175 = vunpack.c.l.b16 %v127
    %v176 = vunpack.c.l.b16 %v128
    %v177 = vunpack.c.l.b16 %v129
    %v178 = vunpack.c.l.b16 %v130
    %v179 = vunpack.c.l.b16 %v131
    %v180 = vunpack.c.l.b16 %v132
    %v181 = vunpack.c.l.b16 %v133
    %v182 = vpack.c.b16 %v167, %v166
    %v183 = vpack.c.b16 %v169, %v168
    %v184 = vpack.c.b16 %v171, %v170
    %v185 = vpack.c.b16 %v173, %v172
    %v186 = vpack.c.b16 %v175, %v174
    %v187 = vpack.c.b16 %v177, %v176
    %v188 = vpack.c.b16 %v179, %v178
    %v189 = vpack.c.b16 %v181, %v180
    %v214 = vunpack.c.l.b16 %v134
    %v215 = vunpack.c.l.b16 %v135
    %v216 = vunpack.c.l.b16 %v136
    %v217 = vunpack.c.l.b16 %v137
    %v218 = vunpack.c.l.b16 %v138
    %v219 = vunpack.c.l.b16 %v139
    %v220 = vunpack.c.l.b16 %v140
    %v221 = vunpack.c.l.b16 %v141
    %v222 = vunpack.c.l.b16 %v142
    %v223 = vunpack.c.l.b16 %v143
    %v224 = vunpack.c.l.b16 %v144
    %v225 = vunpack.c.l.b16 %v145
    %v226 = vunpack.c.l.b16 %v146
    %v227 = vunpack.c.l.b16 %v147
    %v228 = vunpack.c.l.b16 %v148
    %v229 = vunpack.c.l.b16 %v149
    %v230 = vpack.c.b16 %v215, %v214
    %v231 = vpack.c.b16 %v217, %v216
    %v232 = vpack.c.b16 %v219, %v218
    %v233 = vpack.c.b16 %v221, %v220
    %v234 = vpack.c.b16 %v223, %v222
    %v235 = vpack.c.b16 %v225, %v224
    %v236 = vpack.c.b16 %v227, %v226
    %v237 = vpack.c.b16 %v229, %v228
    %246 = vmatprep.subr.bf16.mxu0 0
    %247 = vmatpush1.bf16.msra.mxu0 %v237
    %248 = vmatprep.subr.bf16.mxu0 0
    %249 = vmatpush1.bf16.msra.mxu0 %v236
    %250 = vmatprep.subr.bf16.mxu0 0
    %251 = vmatpush1.bf16.msra.mxu0 %v235
    %252 = vmatprep.subr.bf16.mxu0 0
    %253 = vmatpush1.bf16.msra.mxu0 %v234
    %254 = vmatprep.subr.bf16.mxu0 0
    %255 = vmatpush1.bf16.msra.mxu0 %v233
    %256 = vmatprep.subr.bf16.mxu0 0
    %257 = vmatpush1.bf16.msra.mxu0 %v232
    %258 = vmatprep.subr.bf16.mxu0 0
    %259 = vmatpush1.bf16.msra.mxu0 %v231
    %260 = vmatprep.subr.bf16.mxu0 0
    %261 = vmatpush1.bf16.msra.mxu0 %v230
    %262 = vmatprep.subr.bf16.mxu0 0
    %263 = vmatpush2.bf16.msra.mxu0 0
    %264 = vmatprep.subr.bf16.mxu0 0
    %265 = vmatpush2.bf16.msra.mxu0 0
    %266 = vmatprep.subr.bf16.mxu0 0
    %267 = vmatpush2.bf16.msra.mxu0 0
    %268 = vmatprep.subr.bf16.mxu0 0
    %269 = vmatpush2.bf16.msra.mxu0 0
    %270 = vmatprep.subr.bf16.mxu0 0
    %271 = vmatpush2.bf16.msra.mxu0 0
    %272 = vmatprep.subr.bf16.mxu0 0
    %273 = vmatpush2.bf16.msra.mxu0 0
    %274 = vmatprep.subr.bf16.mxu0 0
    %275 = vmatpush2.bf16.msra.mxu0 0
    %276 = vmatprep.subr.bf16.mxu0 0
    %277 = vmatpush2.bf16.msra.mxu0 0
    %278 = vmatprep.mubr.bf16.mxu0 0
    %279 = vmatmul.mubr.bf16.gmra.mxu0 %v182
    %v280 = vpop.f32.mrf.mxu0
    %v281 = vadd.f32 0.0, %v280
    %v282 = vpop.f32.mrf.mxu0
    %v283 = vpop.f32.mrf.mxu0
    %v284 = vadd.f32 0.0, %v283
    %v285 = vpop.f32.mrf.mxu0
    %286 = vmatprep.mubr.bf16.mxu0 0
    %287 = vmatmul.mubr.bf16.gmra.mxu0 %v183
    %v288 = vpop.f32.mrf.mxu0
    %v289 = vadd.f32 0.0, %v288
    %v290 = vpop.f32.mrf.mxu0
    %v291 = vpop.f32.mrf.mxu0
    %v292 = vadd.f32 0.0, %v291
    %v293 = vpop.f32.mrf.mxu0
    %294 = vmatprep.mubr.bf16.mxu0 0
    %295 = vmatmul.mubr.bf16.gmra.mxu0 %v184
    %v296 = vpop.f32.mrf.mxu0
    %v297 = vadd.f32 0.0, %v296
    %v298 = vpop.f32.mrf.mxu0
    %v299 = vpop.f32.mrf.mxu0
    %v300 = vadd.f32 0.0, %v299
    %v301 = vpop.f32.mrf.mxu0
    %302 = vmatprep.mubr.bf16.mxu0 0
    %303 = vmatmul.mubr.bf16.gmra.mxu0 %v185
    %v304 = vpop.f32.mrf.mxu0
    %v305 = vadd.f32 0.0, %v304
    %v306 = vpop.f32.mrf.mxu0
    %v307 = vpop.f32.mrf.mxu0
    %v308 = vadd.f32 0.0, %v307
    %v309 = vpop.f32.mrf.mxu0
    %310 = vmatprep.mubr.bf16.mxu0 0
    %311 = vmatmul.mubr.bf16.gmra.mxu0 %v186
    %v312 = vpop.f32.mrf.mxu0
    %v313 = vadd.f32 0.0, %v312
    %v314 = vpop.f32.mrf.mxu0
    %v315 = vpop.f32.mrf.mxu0
    %v316 = vadd.f32 0.0, %v315
    %v317 = vpop.f32.mrf.mxu0
    %318 = vmatprep.mubr.bf16.mxu0 0
    %319 = vmatmul.mubr.bf16.gmra.mxu0 %v187
    %v320 = vpop.f32.mrf.mxu0
    %v321 = vadd.f32 0.0, %v320
    %v322 = vpop.f32.mrf.mxu0
    %v323 = vpop.f32.mrf.mxu0
    %v324 = vadd.f32 0.0, %v323
    %v325 = vpop.f32.mrf.mxu0
    %326 = vmatprep.mubr.bf16.mxu0 0
    %327 = vmatmul.mubr.bf16.gmra.mxu0 %v188
    %v328 = vpop.f32.mrf.mxu0
    %v329 = vadd.f32 0.0, %v328
    %v330 = vpop.f32.mrf.mxu0
    %v331 = vpop.f32.mrf.mxu0
    %v332 = vadd.f32 0.0, %v331
    %v333 = vpop.f32.mrf.mxu0
    %334 = vmatprep.mubr.bf16.mxu0 0
    %335 = vmatmul.mubr.bf16.gmra.mxu0 %v189
    %v336 = vpop.f32.mrf.mxu0
    %v337 = vadd.f32 0.0, %v336
    %v338 = vpop.f32.mrf.mxu0
    %v339 = vpop.f32.mrf.mxu0
    %v340 = vadd.f32 0.0, %v339
    %v341 = vpop.f32.mrf.mxu0
    %342 = vdwg.mxu0
    %v343 = vpack.c.bf16 %v284, %v281
    %v344 = vpack.c.bf16 %v292, %v289
    %v345 = vpack.c.bf16 %v300, %v297
    %v346 = vpack.c.bf16 %v308, %v305
    %v347 = vpack.c.bf16 %v316, %v313
    %v348 = vpack.c.bf16 %v324, %v321
    %v349 = vpack.c.bf16 %v332, %v329
    %v350 = vpack.c.bf16 %v340, %v337
    %v351 = vld [vmem:[%s3] sm:$0x1]
    %v353 = vlaneseq
    %v354 = vshrl.u32 %v353, 7
    %v355 = vsub.s32 0, %v354
    %v356 = vrot.slane %v351, %v355
    %v374 = vunpack.c.l.b16 %v102
    %v375 = vunpack.c.l.b16 %v103
    %v376 = vunpack.c.l.b16 %v104
    %v377 = vunpack.c.l.b16 %v105
    %v378 = vunpack.c.l.b16 %v106
    %v379 = vunpack.c.l.b16 %v107
    %v380 = vunpack.c.l.b16 %v108
    %v381 = vunpack.c.l.b16 %v109
    %v382 = vunpack.c.l.b16 %v110
    %v383 = vunpack.c.l.b16 %v111
    %v384 = vunpack.c.l.b16 %v112
    %v385 = vunpack.c.l.b16 %v113
    %v386 = vunpack.c.l.b16 %v114
    %v387 = vunpack.c.l.b16 %v115
    %v388 = vunpack.c.l.b16 %v116
    %v389 = vunpack.c.l.b16 %v117
    %v390 = vpack.c.b16 %v375, %v374
    %v391 = vpack.c.b16 %v377, %v376
    %v392 = vpack.c.b16 %v379, %v378
    %v393 = vpack.c.b16 %v381, %v380
    %v394 = vpack.c.b16 %v383, %v382
    %v395 = vpack.c.b16 %v385, %v384
    %v396 = vpack.c.b16 %v387, %v386
    %v397 = vpack.c.b16 %v389, %v388
    %406 = vmatprep.subr.bf16.mxu0 0
    %407 = vmatpush1.bf16.msra.mxu0 %v350
    %408 = vmatprep.subr.bf16.mxu0 0
    %409 = vmatpush1.bf16.msra.mxu0 %v349
    %410 = vmatprep.subr.bf16.mxu0 0
    %411 = vmatpush1.bf16.msra.mxu0 %v348
    %412 = vmatprep.subr.bf16.mxu0 0
    %413 = vmatpush1.bf16.msra.mxu0 %v347
    %414 = vmatprep.subr.bf16.mxu0 0
    %415 = vmatpush1.bf16.msra.mxu0 %v346
    %416 = vmatprep.subr.bf16.mxu0 0
    %417 = vmatpush1.bf16.msra.mxu0 %v345
    %418 = vmatprep.subr.bf16.mxu0 0
    %419 = vmatpush1.bf16.msra.mxu0 %v344
    %420 = vmatprep.subr.bf16.mxu0 0
    %421 = vmatpush1.bf16.msra.mxu0 %v343
    %422 = vmatprep.subr.bf16.mxu0 0
    %423 = vmatpush2.bf16.msra.mxu0 0
    %424 = vmatprep.subr.bf16.mxu0 0
    %425 = vmatpush2.bf16.msra.mxu0 0
    %426 = vmatprep.subr.bf16.mxu0 0
    %427 = vmatpush2.bf16.msra.mxu0 0
    %428 = vmatprep.subr.bf16.mxu0 0
    %429 = vmatpush2.bf16.msra.mxu0 0
    %430 = vmatprep.subr.bf16.mxu0 0
    %431 = vmatpush2.bf16.msra.mxu0 0
    %432 = vmatprep.subr.bf16.mxu0 0
    %433 = vmatpush2.bf16.msra.mxu0 0
    %434 = vmatprep.subr.bf16.mxu0 0
    %435 = vmatpush2.bf16.msra.mxu0 0
    %436 = vmatprep.subr.bf16.mxu0 0
    %437 = vmatpush2.bf16.msra.mxu0 0
    %438 = vmatprep.mubr.bf16.mxu0 0
    %439 = vmatmul.mubr.bf16.gmra.mxu0 %v390
    %v440 = vpop.f32.mrf.mxu0
    %v441 = vadd.f32 %v356, %v440
    %v442 = vpop.f32.mrf.mxu0
    %v443 = vpop.f32.mrf.mxu0
    %v444 = vadd.f32 %v356, %v443
    %v445 = vpop.f32.mrf.mxu0
    %446 = vmatprep.mubr.bf16.mxu0 0
    %447 = vmatmul.mubr.bf16.gmra.mxu0 %v391
    %v448 = vpop.f32.mrf.mxu0
    %v449 = vadd.f32 %v356, %v448
    %v450 = vpop.f32.mrf.mxu0
    %v451 = vpop.f32.mrf.mxu0
    %v452 = vadd.f32 %v356, %v451
    %v453 = vpop.f32.mrf.mxu0
    %454 = vmatprep.mubr.bf16.mxu0 0
    %455 = vmatmul.mubr.bf16.gmra.mxu0 %v392
    %v456 = vpop.f32.mrf.mxu0
    %v457 = vadd.f32 %v356, %v456
    %v458 = vpop.f32.mrf.mxu0
    %v459 = vpop.f32.mrf.mxu0
    %v460 = vadd.f32 %v356, %v459
    %v461 = vpop.f32.mrf.mxu0
    %462 = vmatprep.mubr.bf16.mxu0 0
    %463 = vmatmul.mubr.bf16.gmra.mxu0 %v393
    %v464 = vpop.f32.mrf.mxu0
    %v465 = vadd.f32 %v356, %v464
    %v466 = vpop.f32.mrf.mxu0
    %v467 = vpop.f32.mrf.mxu0
    %v468 = vadd.f32 %v356, %v467
    %v469 = vpop.f32.mrf.mxu0
    %470 = vmatprep.mubr.bf16.mxu0 0
    %471 = vmatmul.mubr.bf16.gmra.mxu0 %v394
    %v472 = vpop.f32.mrf.mxu0
    %v473 = vadd.f32 %v356, %v472
    %v474 = vpop.f32.mrf.mxu0
    %v475 = vpop.f32.mrf.mxu0
    %v476 = vadd.f32 %v356, %v475
    %v477 = vpop.f32.mrf.mxu0
    %478 = vmatprep.mubr.bf16.mxu0 0
    %479 = vmatmul.mubr.bf16.gmra.mxu0 %v395
    %v480 = vpop.f32.mrf.mxu0
    %v481 = vadd.f32 %v356, %v480
    %v482 = vpop.f32.mrf.mxu0
    %v483 = vpop.f32.mrf.mxu0
    %v484 = vadd.f32 %v356, %v483
    %v485 = vpop.f32.mrf.mxu0
    %486 = vmatprep.mubr.bf16.mxu0 0
    %487 = vmatmul.mubr.bf16.gmra.mxu0 %v396
    %v488 = vpop.f32.mrf.mxu0
    %v489 = vadd.f32 %v356, %v488
    %v490 = vpop.f32.mrf.mxu0
    %v491 = vpop.f32.mrf.mxu0
    %v492 = vadd.f32 %v356, %v491
    %v493 = vpop.f32.mrf.mxu0
    %494 = vmatprep.mubr.bf16.mxu0 0
    %495 = vmatmul.mubr.bf16.gmra.mxu0 %v397
    %v496 = vpop.f32.mrf.mxu0
    %v497 = vadd.f32 %v356, %v496
    %v498 = vpop.f32.mrf.mxu0
    %v499 = vpop.f32.mrf.mxu0
    %v500 = vadd.f32 %v356, %v499
    %v501 = vpop.f32.mrf.mxu0
    %502 = vdwg.mxu0
    %v503 = vmax.f32 %v441, 0.0
    %v504 = vmax.f32 %v444, 0.0
    %v505 = vmax.f32 %v449, 0.0
    %v506 = vmax.f32 %v452, 0.0
    %v507 = vmax.f32 %v457, 0.0
    %v508 = vmax.f32 %v460, 0.0
    %v509 = vmax.f32 %v465, 0.0
    %v510 = vmax.f32 %v468, 0.0
    %v511 = vmax.f32 %v473, 0.0
    %v512 = vmax.f32 %v476, 0.0
    %v513 = vmax.f32 %v481, 0.0
    %v514 = vmax.f32 %v484, 0.0
    %v515 = vmax.f32 %v489, 0.0
    %v516 = vmax.f32 %v492, 0.0
    %v517 = vmax.f32 %v497, 0.0
    %v518 = vmax.f32 %v500, 0.0
    %v519 = vpack.c.bf16 %v504, %v503
    %v520 = vpack.c.bf16 %v506, %v505
    %v521 = vpack.c.bf16 %v508, %v507
    %v522 = vpack.c.bf16 %v510, %v509
    %v523 = vpack.c.bf16 %v512, %v511
    %v524 = vpack.c.bf16 %v514, %v513
    %v525 = vpack.c.bf16 %v516, %v515
    %v526 = vpack.c.bf16 %v518, %v517
    %v527 = vld [vmem:[#allocation8] sm:$0xf]
    %v528 = vld [vmem:[#allocation8 + $0x4] sm:$0xf]
    %v529 = vld [vmem:[#allocation8 + $0x8] sm:$0xf]
    %v530 = vld [vmem:[#allocation8 + $0xc] sm:$0xf]
    %v531 = vld [vmem:[#allocation8 + $0x10] sm:$0xf]
    %v532 = vld [vmem:[#allocation8 + $0x14] sm:$0xf]
    %v533 = vld [vmem:[#allocation8 + $0x18] sm:$0xf]
    %v534 = vld [vmem:[#allocation8 + $0x1c] sm:$0xf]
    %v535 = vld [vmem:[#allocation8 + $0x20] sm:$0xf]
    %v536 = vld [vmem:[#allocation8 + $0x24] sm:$0xf]
    %v537 = vld [vmem:[#allocation8 + $0x28] sm:$0xf]
    %v538 = vld [vmem:[#allocation8 + $0x2c] sm:$0xf]
    %v539 = vld [vmem:[#allocation8 + $0x30] sm:$0xf]
    %v540 = vld [vmem:[#allocation8 + $0x34] sm:$0xf]
    %v541 = vld [vmem:[#allocation8 + $0x38] sm:$0xf]
    %v542 = vld [vmem:[#allocation8 + $0x3c] sm:$0xf]
    %v559 = vunpack.c.l.b16 %v527
    %v560 = vunpack.c.l.b16 %v528
    %v561 = vunpack.c.l.b16 %v529
    %v562 = vunpack.c.l.b16 %v530
    %v563 = vunpack.c.l.b16 %v531
    %v564 = vunpack.c.l.b16 %v532
    %v565 = vunpack.c.l.b16 %v533
    %v566 = vunpack.c.l.b16 %v534
    %v567 = vunpack.c.l.b16 %v535
    %v568 = vunpack.c.l.b16 %v536
    %v569 = vunpack.c.l.b16 %v537
    %v570 = vunpack.c.l.b16 %v538
    %v571 = vunpack.c.l.b16 %v539
    %v572 = vunpack.c.l.b16 %v540
    %v573 = vunpack.c.l.b16 %v541
    %v574 = vunpack.c.l.b16 %v542
    %v575 = vpack.c.b16 %v560, %v559
    %v576 = vpack.c.b16 %v562, %v561
    %v577 = vpack.c.b16 %v564, %v563
    %v578 = vpack.c.b16 %v566, %v565
    %v579 = vpack.c.b16 %v568, %v567
    %v580 = vpack.c.b16 %v570, %v569
    %v581 = vpack.c.b16 %v572, %v571
    %v582 = vpack.c.b16 %v574, %v573
    %591 = vmatprep.subr.bf16.mxu0 0
    %592 = vmatpush1.bf16.msra.mxu0 %v582
    %593 = vmatprep.subr.bf16.mxu0 0
    %594 = vmatpush1.bf16.msra.mxu0 %v581
    %595 = vmatprep.subr.bf16.mxu0 0
    %596 = vmatpush1.bf16.msra.mxu0 %v580
    %597 = vmatprep.subr.bf16.mxu0 0
    %598 = vmatpush1.bf16.msra.mxu0 %v579
    %599 = vmatprep.subr.bf16.mxu0 0
    %600 = vmatpush1.bf16.msra.mxu0 %v578
    %601 = vmatprep.subr.bf16.mxu0 0
    %602 = vmatpush1.bf16.msra.mxu0 %v577
    %603 = vmatprep.subr.bf16.mxu0 0
    %604 = vmatpush1.bf16.msra.mxu0 %v576
    %605 = vmatprep.subr.bf16.mxu0 0
    %606 = vmatpush1.bf16.msra.mxu0 %v575
    %607 = vmatprep.subr.bf16.mxu0 0
    %608 = vmatpush2.bf16.msra.mxu0 0
    %609 = vmatprep.subr.bf16.mxu0 0
    %610 = vmatpush2.bf16.msra.mxu0 0
    %611 = vmatprep.subr.bf16.mxu0 0
    %612 = vmatpush2.bf16.msra.mxu0 0
    %613 = vmatprep.subr.bf16.mxu0 0
    %614 = vmatpush2.bf16.msra.mxu0 0
    %615 = vmatprep.subr.bf16.mxu0 0
    %616 = vmatpush2.bf16.msra.mxu0 0
    %617 = vmatprep.subr.bf16.mxu0 0
    %618 = vmatpush2.bf16.msra.mxu0 0
    %619 = vmatprep.subr.bf16.mxu0 0
    %620 = vmatpush2.bf16.msra.mxu0 0
    %621 = vmatprep.subr.bf16.mxu0 0
    %622 = vmatpush2.bf16.msra.mxu0 0
    %623 = vmatprep.mubr.bf16.mxu0 0
    %624 = vmatmul.mubr.bf16.gmra.mxu0 %v519
    %v625 = vpop.f32.mrf.mxu0
    %v626 = vadd.f32 0.0, %v625
    %v627 = vpop.f32.mrf.mxu0
    %v628 = vpop.f32.mrf.mxu0
    %v629 = vadd.f32 0.0, %v628
    %v630 = vpop.f32.mrf.mxu0
    %631 = vmatprep.mubr.bf16.mxu0 0
    %632 = vmatmul.mubr.bf16.gmra.mxu0 %v520
    %v633 = vpop.f32.mrf.mxu0
    %v634 = vadd.f32 0.0, %v633
    %v635 = vpop.f32.mrf.mxu0
    %v636 = vpop.f32.mrf.mxu0
    %v637 = vadd.f32 0.0, %v636
    %v638 = vpop.f32.mrf.mxu0
    %639 = vmatprep.mubr.bf16.mxu0 0
    %640 = vmatmul.mubr.bf16.gmra.mxu0 %v521
    %v641 = vpop.f32.mrf.mxu0
    %v642 = vadd.f32 0.0, %v641
    %v643 = vpop.f32.mrf.mxu0
    %v644 = vpop.f32.mrf.mxu0
    %v645 = vadd.f32 0.0, %v644
    %v646 = vpop.f32.mrf.mxu0
    %647 = vmatprep.mubr.bf16.mxu0 0
    %648 = vmatmul.mubr.bf16.gmra.mxu0 %v522
    %v649 = vpop.f32.mrf.mxu0
    %v650 = vadd.f32 0.0, %v649
    %v651 = vpop.f32.mrf.mxu0
    %v652 = vpop.f32.mrf.mxu0
    %v653 = vadd.f32 0.0, %v652
    %v654 = vpop.f32.mrf.mxu0
    %655 = vmatprep.mubr.bf16.mxu0 0
    %656 = vmatmul.mubr.bf16.gmra.mxu0 %v523
    %v657 = vpop.f32.mrf.mxu0
    %v658 = vadd.f32 0.0, %v657
    %v659 = vpop.f32.mrf.mxu0
    %v660 = vpop.f32.mrf.mxu0
    %v661 = vadd.f32 0.0, %v660
    %v662 = vpop.f32.mrf.mxu0
    %663 = vmatprep.mubr.bf16.mxu0 0
    %664 = vmatmul.mubr.bf16.gmra.mxu0 %v524
    %v665 = vpop.f32.mrf.mxu0
    %v666 = vadd.f32 0.0, %v665
    %v667 = vpop.f32.mrf.mxu0
    %v668 = vpop.f32.mrf.mxu0
    %v669 = vadd.f32 0.0, %v668
    %v670 = vpop.f32.mrf.mxu0
    %671 = vmatprep.mubr.bf16.mxu0 0
    %672 = vmatmul.mubr.bf16.gmra.mxu0 %v525
    %v673 = vpop.f32.mrf.mxu0
    %v674 = vadd.f32 0.0, %v673
    %v675 = vpop.f32.mrf.mxu0
    %v676 = vpop.f32.mrf.mxu0
    %v677 = vadd.f32 0.0, %v676
    %v678 = vpop.f32.mrf.mxu0
    %679 = vmatprep.mubr.bf16.mxu0 0
    %680 = vmatmul.mubr.bf16.gmra.mxu0 %v526
    %v681 = vpop.f32.mrf.mxu0
    %v682 = vadd.f32 0.0, %v681
    %v683 = vpop.f32.mrf.mxu0
    %v684 = vpop.f32.mrf.mxu0
    %v685 = vadd.f32 0.0, %v684
    %v686 = vpop.f32.mrf.mxu0
    %687 = vdwg.mxu0
    %v688 = vpack.c.bf16 %v629, %v626
    %v689 = vpack.c.bf16 %v637, %v634
    %v690 = vpack.c.bf16 %v645, %v642
    %v691 = vpack.c.bf16 %v653, %v650
    %v692 = vpack.c.bf16 %v661, %v658
    %v693 = vpack.c.bf16 %v669, %v666
    %v694 = vpack.c.bf16 %v677, %v674
    %v695 = vpack.c.bf16 %v685, %v682
    %v696 = vld [vmem:[%s5] sm:$0x1]
    %v698 = vlaneseq
    %v699 = vshrl.u32 %v698, 7
    %v700 = vsub.s32 0, %v699
    %v701 = vrot.slane %v696, %v700
    %703 = vmatprep.subr.bf16.mxu0 0
    %704 = vmatpush1.bf16.msra.mxu0 %v695
    %705 = vmatprep.subr.bf16.mxu0 0
    %706 = vmatpush1.bf16.msra.mxu0 %v694
    %707 = vmatprep.subr.bf16.mxu0 0
    %708 = vmatpush1.bf16.msra.mxu0 %v693
    %709 = vmatprep.subr.bf16.mxu0 0
    %710 = vmatpush1.bf16.msra.mxu0 %v692
    %711 = vmatprep.subr.bf16.mxu0 0
    %712 = vmatpush1.bf16.msra.mxu0 %v691
    %713 = vmatprep.subr.bf16.mxu0 0
    %714 = vmatpush1.bf16.msra.mxu0 %v690
    %715 = vmatprep.subr.bf16.mxu0 0
    %716 = vmatpush1.bf16.msra.mxu0 %v689
    %717 = vmatprep.subr.bf16.mxu0 0
    %718 = vmatpush1.bf16.msra.mxu0 %v688
    %719 = vmatprep.subr.bf16.mxu0 0
    %720 = vmatpush2.bf16.msra.mxu0 0
    %721 = vmatprep.subr.bf16.mxu0 0
    %722 = vmatpush2.bf16.msra.mxu0 0
    %723 = vmatprep.subr.bf16.mxu0 0
    %724 = vmatpush2.bf16.msra.mxu0 0
    %725 = vmatprep.subr.bf16.mxu0 0
    %726 = vmatpush2.bf16.msra.mxu0 0
    %727 = vmatprep.subr.bf16.mxu0 0
    %728 = vmatpush2.bf16.msra.mxu0 0
    %729 = vmatprep.subr.bf16.mxu0 0
    %730 = vmatpush2.bf16.msra.mxu0 0
    %731 = vmatprep.subr.bf16.mxu0 0
    %732 = vmatpush2.bf16.msra.mxu0 0
    %733 = vmatprep.subr.bf16.mxu0 0
    %734 = vmatpush2.bf16.msra.mxu0 0
    %735 = vmatprep.mubr.bf16.mxu0 0
    %736 = vmatmul.mubr.bf16.gmra.mxu0 %v390
    %v737 = vpop.f32.mrf.mxu0
    %v738 = vadd.f32 %v701, %v737
    %v739 = vpop.f32.mrf.mxu0
    %v740 = vpop.f32.mrf.mxu0
    %v741 = vadd.f32 %v701, %v740
    %v742 = vpop.f32.mrf.mxu0
    %743 = vmatprep.mubr.bf16.mxu0 0
    %744 = vmatmul.mubr.bf16.gmra.mxu0 %v391
    %v745 = vpop.f32.mrf.mxu0
    %v746 = vadd.f32 %v701, %v745
    %v747 = vpop.f32.mrf.mxu0
    %v748 = vpop.f32.mrf.mxu0
    %v749 = vadd.f32 %v701, %v748
    %v750 = vpop.f32.mrf.mxu0
    %751 = vmatprep.mubr.bf16.mxu0 0
    %752 = vmatmul.mubr.bf16.gmra.mxu0 %v392
    %v753 = vpop.f32.mrf.mxu0
    %v754 = vadd.f32 %v701, %v753
    %v755 = vpop.f32.mrf.mxu0
    %v756 = vpop.f32.mrf.mxu0
    %v757 = vadd.f32 %v701, %v756
    %v758 = vpop.f32.mrf.mxu0
    %759 = vmatprep.mubr.bf16.mxu0 0
    %760 = vmatmul.mubr.bf16.gmra.mxu0 %v393
    %v761 = vpop.f32.mrf.mxu0
    %v762 = vadd.f32 %v701, %v761
    %v763 = vpop.f32.mrf.mxu0
    %v764 = vpop.f32.mrf.mxu0
    %v765 = vadd.f32 %v701, %v764
    %v766 = vpop.f32.mrf.mxu0
    %767 = vmatprep.mubr.bf16.mxu0 0
    %768 = vmatmul.mubr.bf16.gmra.mxu0 %v394
    %v769 = vpop.f32.mrf.mxu0
    %v770 = vadd.f32 %v701, %v769
    %v771 = vpop.f32.mrf.mxu0
    %v772 = vpop.f32.mrf.mxu0
    %v773 = vadd.f32 %v701, %v772
    %v774 = vpop.f32.mrf.mxu0
    %775 = vmatprep.mubr.bf16.mxu0 0
    %776 = vmatmul.mubr.bf16.gmra.mxu0 %v395
    %v777 = vpop.f32.mrf.mxu0
    %v778 = vadd.f32 %v701, %v777
    %v779 = vpop.f32.mrf.mxu0
    %v780 = vpop.f32.mrf.mxu0
    %v781 = vadd.f32 %v701, %v780
    %v782 = vpop.f32.mrf.mxu0
    %783 = vmatprep.mubr.bf16.mxu0 0
    %784 = vmatmul.mubr.bf16.gmra.mxu0 %v396
    %v785 = vpop.f32.mrf.mxu0
    %v786 = vadd.f32 %v701, %v785
    %v787 = vpop.f32.mrf.mxu0
    %v788 = vpop.f32.mrf.mxu0
    %v789 = vadd.f32 %v701, %v788
    %v790 = vpop.f32.mrf.mxu0
    %791 = vmatprep.mubr.bf16.mxu0 0
    %792 = vmatmul.mubr.bf16.gmra.mxu0 %v397
    %v793 = vpop.f32.mrf.mxu0
    %v794 = vadd.f32 %v701, %v793
    %v795 = vpop.f32.mrf.mxu0
    %v796 = vpop.f32.mrf.mxu0
    %v797 = vadd.f32 %v701, %v796
    %v798 = vpop.f32.mrf.mxu0
    %799 = vdwg.mxu0
    %v800 = vmax.f32 %v738, 0.0
    %v801 = vmax.f32 %v741, 0.0
    %v802 = vmax.f32 %v746, 0.0
    %v803 = vmax.f32 %v749, 0.0
    %v804 = vmax.f32 %v754, 0.0
    %v805 = vmax.f32 %v757, 0.0
    %v806 = vmax.f32 %v762, 0.0
    %v807 = vmax.f32 %v765, 0.0
    %v808 = vmax.f32 %v770, 0.0
    %v809 = vmax.f32 %v773, 0.0
    %v810 = vmax.f32 %v778, 0.0
    %v811 = vmax.f32 %v781, 0.0
    %v812 = vmax.f32 %v786, 0.0
    %v813 = vmax.f32 %v789, 0.0
    %v814 = vmax.f32 %v794, 0.0
    %v815 = vmax.f32 %v797, 0.0
    %816 = vst [vmem:[#allocation12] sm:$0xff] %v800
    %817 = vst [vmem:[#allocation12 + $0x8] sm:$0xff] %v801
    %818 = vst [vmem:[#allocation12 + $0x10] sm:$0xff] %v802
    %819 = vst [vmem:[#allocation12 + $0x18] sm:$0xff] %v803
    %820 = vst [vmem:[#allocation12 + $0x20] sm:$0xff] %v804
    %821 = vst [vmem:[#allocation12 + $0x28] sm:$0xff] %v805
    %822 = vst [vmem:[#allocation12 + $0x30] sm:$0xff] %v806
    %823 = vst [vmem:[#allocation12 + $0x38] sm:$0xff] %v807
    %824 = vst [vmem:[#allocation12 + $0x40] sm:$0xff] %v808
    %825 = vst [vmem:[#allocation12 + $0x48] sm:$0xff] %v809
    %826 = vst [vmem:[#allocation12 + $0x50] sm:$0xff] %v810
    %827 = vst [vmem:[#allocation12 + $0x58] sm:$0xff] %v811
    %828 = vst [vmem:[#allocation12 + $0x60] sm:$0xff] %v812
    %829 = vst [vmem:[#allocation12 + $0x68] sm:$0xff] %v813
    %830 = vst [vmem:[#allocation12 + $0x70] sm:$0xff] %v814
    %831 = vst [vmem:[#allocation12 + $0x78] sm:$0xff] %v815
    %v832 = vpack.c.bf16 %v801, %v800
    %v833 = vpack.c.bf16 %v803, %v802
    %v834 = vpack.c.bf16 %v805, %v804
    %v835 = vpack.c.bf16 %v807, %v806
    %v836 = vpack.c.bf16 %v809, %v808
    %v837 = vpack.c.bf16 %v811, %v810
    %v838 = vpack.c.bf16 %v813, %v812
    %v839 = vpack.c.bf16 %v815, %v814
    %v840 = vld [vmem:[#allocation10] sm:$0xf]
    %v841 = vld [vmem:[#allocation10 + $0x4] sm:$0xf]
    %v842 = vld [vmem:[#allocation10 + $0x8] sm:$0xf]
    %v843 = vld [vmem:[#allocation10 + $0xc] sm:$0xf]
    %v844 = vld [vmem:[#allocation10 + $0x10] sm:$0xf]
    %v845 = vld [vmem:[#allocation10 + $0x14] sm:$0xf]
    %v846 = vld [vmem:[#allocation10 + $0x18] sm:$0xf]
    %v847 = vld [vmem:[#allocation10 + $0x1c] sm:$0xf]
    %v848 = vld [vmem:[#allocation10 + $0x20] sm:$0xf]
    %v849 = vld [vmem:[#allocation10 + $0x24] sm:$0xf]
    %v850 = vld [vmem:[#allocation10 + $0x28] sm:$0xf]
    %v851 = vld [vmem:[#allocation10 + $0x2c] sm:$0xf]
    %v852 = vld [vmem:[#allocation10 + $0x30] sm:$0xf]
    %v853 = vld [vmem:[#allocation10 + $0x34] sm:$0xf]
    %v854 = vld [vmem:[#allocation10 + $0x38] sm:$0xf]
    %v855 = vld [vmem:[#allocation10 + $0x3c] sm:$0xf]
    %v872 = vunpack.c.l.b16 %v840
    %v873 = vunpack.c.l.b16 %v841
    %v874 = vunpack.c.l.b16 %v842
    %v875 = vunpack.c.l.b16 %v843
    %v876 = vunpack.c.l.b16 %v844
    %v877 = vunpack.c.l.b16 %v845
    %v878 = vunpack.c.l.b16 %v846
    %v879 = vunpack.c.l.b16 %v847
    %v880 = vunpack.c.l.b16 %v848
    %v881 = vunpack.c.l.b16 %v849
    %v882 = vunpack.c.l.b16 %v850
    %v883 = vunpack.c.l.b16 %v851
    %v884 = vunpack.c.l.b16 %v852
    %v885 = vunpack.c.l.b16 %v853
    %v886 = vunpack.c.l.b16 %v854
    %v887 = vunpack.c.l.b16 %v855
    %v888 = vpack.c.b16 %v873, %v872
    %v889 = vpack.c.b16 %v875, %v874
    %v890 = vpack.c.b16 %v877, %v876
    %v891 = vpack.c.b16 %v879, %v878
    %v892 = vpack.c.b16 %v881, %v880
    %v893 = vpack.c.b16 %v883, %v882
    %v894 = vpack.c.b16 %v885, %v884
    %v895 = vpack.c.b16 %v887, %v886
    %904 = vmatprep.subr.bf16.mxu0 0
    %905 = vmatpush1.bf16.msra.mxu0 %v895
    %906 = vmatprep.subr.bf16.mxu0 0
    %907 = vmatpush1.bf16.msra.mxu0 %v894
    %908 = vmatprep.subr.bf16.mxu0 0
    %909 = vmatpush1.bf16.msra.mxu0 %v893
    %910 = vmatprep.subr.bf16.mxu0 0
    %911 = vmatpush1.bf16.msra.mxu0 %v892
    %912 = vmatprep.subr.bf16.mxu0 0
    %913 = vmatpush1.bf16.msra.mxu0 %v891
    %914 = vmatprep.subr.bf16.mxu0 0
    %915 = vmatpush1.bf16.msra.mxu0 %v890
    %916 = vmatprep.subr.bf16.mxu0 0
    %917 = vmatpush1.bf16.msra.mxu0 %v889
    %918 = vmatprep.subr.bf16.mxu0 0
    %919 = vmatpush1.bf16.msra.mxu0 %v888
    %920 = vmatprep.subr.bf16.mxu0 0
    %921 = vmatpush2.bf16.msra.mxu0 0
    %922 = vmatprep.subr.bf16.mxu0 0
    %923 = vmatpush2.bf16.msra.mxu0 0
    %924 = vmatprep.subr.bf16.mxu0 0
    %925 = vmatpush2.bf16.msra.mxu0 0
    %926 = vmatprep.subr.bf16.mxu0 0
    %927 = vmatpush2.bf16.msra.mxu0 0
    %928 = vmatprep.subr.bf16.mxu0 0
    %929 = vmatpush2.bf16.msra.mxu0 0
    %930 = vmatprep.subr.bf16.mxu0 0
    %931 = vmatpush2.bf16.msra.mxu0 0
    %932 = vmatprep.subr.bf16.mxu0 0
    %933 = vmatpush2.bf16.msra.mxu0 0
    %934 = vmatprep.subr.bf16.mxu0 0
    %935 = vmatpush2.bf16.msra.mxu0 0
    %936 = vmatprep.mubr.bf16.mxu0 0
    %937 = vmatmul.mubr.bf16.gmra.mxu0 %v832
    %v938 = vpop.f32.mrf.mxu0
    %v939 = vadd.f32 0.0, %v938
    %v940 = vpop.f32.mrf.mxu0
    %v941 = vpop.f32.mrf.mxu0
    %v942 = vadd.f32 0.0, %v941
    %v943 = vpop.f32.mrf.mxu0
    %944 = vmatprep.mubr.bf16.mxu0 0
    %945 = vmatmul.mubr.bf16.gmra.mxu0 %v833
    %v946 = vpop.f32.mrf.mxu0
    %v947 = vadd.f32 0.0, %v946
    %v948 = vpop.f32.mrf.mxu0
    %v949 = vpop.f32.mrf.mxu0
    %v950 = vadd.f32 0.0, %v949
    %v951 = vpop.f32.mrf.mxu0
    %952 = vmatprep.mubr.bf16.mxu0 0
    %953 = vmatmul.mubr.bf16.gmra.mxu0 %v834
    %v954 = vpop.f32.mrf.mxu0
    %v955 = vadd.f32 0.0, %v954
    %v956 = vpop.f32.mrf.mxu0
    %v957 = vpop.f32.mrf.mxu0
    %v958 = vadd.f32 0.0, %v957
    %v959 = vpop.f32.mrf.mxu0
    %960 = vmatprep.mubr.bf16.mxu0 0
    %961 = vmatmul.mubr.bf16.gmra.mxu0 %v835
    %v962 = vpop.f32.mrf.mxu0
    %v963 = vadd.f32 0.0, %v962
    %v964 = vpop.f32.mrf.mxu0
    %v965 = vpop.f32.mrf.mxu0
    %v966 = vadd.f32 0.0, %v965
    %v967 = vpop.f32.mrf.mxu0
    %968 = vmatprep.mubr.bf16.mxu0 0
    %969 = vmatmul.mubr.bf16.gmra.mxu0 %v836
    %v970 = vpop.f32.mrf.mxu0
    %v971 = vadd.f32 0.0, %v970
    %v972 = vpop.f32.mrf.mxu0
    %v973 = vpop.f32.mrf.mxu0
    %v974 = vadd.f32 0.0, %v973
    %v975 = vpop.f32.mrf.mxu0
    %976 = vmatprep.mubr.bf16.mxu0 0
    %977 = vmatmul.mubr.bf16.gmra.mxu0 %v837
    %v978 = vpop.f32.mrf.mxu0
    %v979 = vadd.f32 0.0, %v978
    %v980 = vpop.f32.mrf.mxu0
    %v981 = vpop.f32.mrf.mxu0
    %v982 = vadd.f32 0.0, %v981
    %v983 = vpop.f32.mrf.mxu0
    %984 = vmatprep.mubr.bf16.mxu0 0
    %985 = vmatmul.mubr.bf16.gmra.mxu0 %v838
    %v986 = vpop.f32.mrf.mxu0
    %v987 = vadd.f32 0.0, %v986
    %v988 = vpop.f32.mrf.mxu0
    %v989 = vpop.f32.mrf.mxu0
    %v990 = vadd.f32 0.0, %v989
    %v991 = vpop.f32.mrf.mxu0
    %992 = vmatprep.mubr.bf16.mxu0 0
    %993 = vmatmul.mubr.bf16.gmra.mxu0 %v839
    %v994 = vpop.f32.mrf.mxu0
    %v995 = vadd.f32 0.0, %v994
    %v996 = vpop.f32.mrf.mxu0
    %v997 = vpop.f32.mrf.mxu0
    %v998 = vadd.f32 0.0, %v997
    %v999 = vpop.f32.mrf.mxu0
    %1000 = vdwg.mxu0
    %v1001 = vpack.c.bf16 %v942, %v939
    %v1002 = vpack.c.bf16 %v950, %v947
    %v1003 = vpack.c.bf16 %v958, %v955
    %v1004 = vpack.c.bf16 %v966, %v963
    %v1005 = vpack.c.bf16 %v974, %v971
    %v1006 = vpack.c.bf16 %v982, %v979
    %v1007 = vpack.c.bf16 %v990, %v987
    %v1008 = vpack.c.bf16 %v998, %v995
    %v1009 = vld [vmem:[%s7] sm:$0x1]
    %v1011 = vlaneseq
    %v1012 = vshrl.u32 %v1011, 7
    %v1013 = vsub.s32 0, %v1012
    %v1014 = vrot.slane %v1009, %v1013
    %1016 = vmatprep.subr.bf16.mxu0 0
    %1017 = vmatpush1.bf16.msra.mxu0 %v1008
    %1018 = vmatprep.subr.bf16.mxu0 0
    %1019 = vmatpush1.bf16.msra.mxu0 %v1007
    %1020 = vmatprep.subr.bf16.mxu0 0
    %1021 = vmatpush1.bf16.msra.mxu0 %v1006
    %1022 = vmatprep.subr.bf16.mxu0 0
    %1023 = vmatpush1.bf16.msra.mxu0 %v1005
    %1024 = vmatprep.subr.bf16.mxu0 0
    %1025 = vmatpush1.bf16.msra.mxu0 %v1004
    %1026 = vmatprep.subr.bf16.mxu0 0
    %1027 = vmatpush1.bf16.msra.mxu0 %v1003
    %1028 = vmatprep.subr.bf16.mxu0 0
    %1029 = vmatpush1.bf16.msra.mxu0 %v1002
    %1030 = vmatprep.subr.bf16.mxu0 0
    %1031 = vmatpush1.bf16.msra.mxu0 %v1001
    %1032 = vmatprep.subr.bf16.mxu0 0
    %1033 = vmatpush2.bf16.msra.mxu0 0
    %1034 = vmatprep.subr.bf16.mxu0 0
    %1035 = vmatpush2.bf16.msra.mxu0 0
    %1036 = vmatprep.subr.bf16.mxu0 0
    %1037 = vmatpush2.bf16.msra.mxu0 0
    %1038 = vmatprep.subr.bf16.mxu0 0
    %1039 = vmatpush2.bf16.msra.mxu0 0
    %1040 = vmatprep.subr.bf16.mxu0 0
    %1041 = vmatpush2.bf16.msra.mxu0 0
    %1042 = vmatprep.subr.bf16.mxu0 0
    %1043 = vmatpush2.bf16.msra.mxu0 0
    %1044 = vmatprep.subr.bf16.mxu0 0
    %1045 = vmatpush2.bf16.msra.mxu0 0
    %1046 = vmatprep.subr.bf16.mxu0 0
    %1047 = vmatpush2.bf16.msra.mxu0 0
    %1048 = vmatprep.mubr.bf16.mxu0 0
    %1049 = vmatmul.mubr.bf16.gmra.mxu0 %v390
    %v1050 = vpop.f32.mrf.mxu0
    %v1051 = vadd.f32 %v1014, %v1050
    %v1052 = vpop.f32.mrf.mxu0
    %v1053 = vpop.f32.mrf.mxu0
    %v1054 = vadd.f32 %v1014, %v1053
    %v1055 = vpop.f32.mrf.mxu0
    %1056 = vmatprep.mubr.bf16.mxu0 0
    %1057 = vmatmul.mubr.bf16.gmra.mxu0 %v391
    %v1058 = vpop.f32.mrf.mxu0
    %v1059 = vadd.f32 %v1014, %v1058
    %v1060 = vpop.f32.mrf.mxu0
    %v1061 = vpop.f32.mrf.mxu0
    %v1062 = vadd.f32 %v1014, %v1061
    %v1063 = vpop.f32.mrf.mxu0
    %1064 = vmatprep.mubr.bf16.mxu0 0
    %1065 = vmatmul.mubr.bf16.gmra.mxu0 %v392
    %v1066 = vpop.f32.mrf.mxu0
    %v1067 = vadd.f32 %v1014, %v1066
    %v1068 = vpop.f32.mrf.mxu0
    %v1069 = vpop.f32.mrf.mxu0
    %v1070 = vadd.f32 %v1014, %v1069
    %v1071 = vpop.f32.mrf.mxu0
    %1072 = vmatprep.mubr.bf16.mxu0 0
    %1073 = vmatmul.mubr.bf16.gmra.mxu0 %v393
    %v1074 = vpop.f32.mrf.mxu0
    %v1075 = vadd.f32 %v1014, %v1074
    %v1076 = vpop.f32.mrf.mxu0
    %v1077 = vpop.f32.mrf.mxu0
    %v1078 = vadd.f32 %v1014, %v1077
    %v1079 = vpop.f32.mrf.mxu0
    %1080 = vmatprep.mubr.bf16.mxu0 0
    %1081 = vmatmul.mubr.bf16.gmra.mxu0 %v394
    %v1082 = vpop.f32.mrf.mxu0
    %v1083 = vadd.f32 %v1014, %v1082
    %v1084 = vpop.f32.mrf.mxu0
    %v1085 = vpop.f32.mrf.mxu0
    %v1086 = vadd.f32 %v1014, %v1085
    %v1087 = vpop.f32.mrf.mxu0
    %1088 = vmatprep.mubr.bf16.mxu0 0
    %1089 = vmatmul.mubr.bf16.gmra.mxu0 %v395
    %v1090 = vpop.f32.mrf.mxu0
    %v1091 = vadd.f32 %v1014, %v1090
    %v1092 = vpop.f32.mrf.mxu0
    %v1093 = vpop.f32.mrf.mxu0
    %v1094 = vadd.f32 %v1014, %v1093
    %v1095 = vpop.f32.mrf.mxu0
    %1096 = vmatprep.mubr.bf16.mxu0 0
    %1097 = vmatmul.mubr.bf16.gmra.mxu0 %v396
    %v1098 = vpop.f32.mrf.mxu0
    %v1099 = vadd.f32 %v1014, %v1098
    %v1100 = vpop.f32.mrf.mxu0
    %v1101 = vpop.f32.mrf.mxu0
    %v1102 = vadd.f32 %v1014, %v1101
    %v1103 = vpop.f32.mrf.mxu0
    %1104 = vmatprep.mubr.bf16.mxu0 0
    %1105 = vmatmul.mubr.bf16.gmra.mxu0 %v397
    %v1106 = vpop.f32.mrf.mxu0
    %v1107 = vadd.f32 %v1014, %v1106
    %v1108 = vpop.f32.mrf.mxu0
    %v1109 = vpop.f32.mrf.mxu0
    %v1110 = vadd.f32 %v1014, %v1109
    %v1111 = vpop.f32.mrf.mxu0
    %1112 = vdwg.mxu0
    %1113 = vst [vmem:[#allocation11] sm:$0xff] %v1051
    %1114 = vst [vmem:[#allocation11 + $0x8] sm:$0xff] %v1054
    %1115 = vst [vmem:[#allocation11 + $0x10] sm:$0xff] %v1059
    %1116 = vst [vmem:[#allocation11 + $0x18] sm:$0xff] %v1062
    %1117 = vst [vmem:[#allocation11 + $0x20] sm:$0xff] %v1067
    %1118 = vst [vmem:[#allocation11 + $0x28] sm:$0xff] %v1070
    %1119 = vst [vmem:[#allocation11 + $0x30] sm:$0xff] %v1075
    %1120 = vst [vmem:[#allocation11 + $0x38] sm:$0xff] %v1078
    %1121 = vst [vmem:[#allocation11 + $0x40] sm:$0xff] %v1083
    %1122 = vst [vmem:[#allocation11 + $0x48] sm:$0xff] %v1086
    %1123 = vst [vmem:[#allocation11 + $0x50] sm:$0xff] %v1091
    %1124 = vst [vmem:[#allocation11 + $0x58] sm:$0xff] %v1094
    %1125 = vst [vmem:[#allocation11 + $0x60] sm:$0xff] %v1099
    %1126 = vst [vmem:[#allocation11 + $0x68] sm:$0xff] %v1102
    %1127 = vst [vmem:[#allocation11 + $0x70] sm:$0xff] %v1107
    %1128 = vst [vmem:[#allocation11 + $0x78] sm:$0xff] %v1110
    // Predicated region
    $region54: #{tpu_custom_call.1} parent=1 // pred_check
      _
    $region55: #{tpu_custom_call.1} parent=1 // pred_check_branch
      %1130 = sbr.rel (0) target = $region57
    $region56: #{tpu_custom_call.1} parent=1 // pred_region
      %s1132 = ssub.s32 2048, 2048
      %1133 = vsyncadd [#allocation4], %s1132
      %s1134 = sshll.u32 [#allocation11], 4
      %s1135 = int_to_ptr.vmem [resolvable:$true] %s1134
      %1140 = dma.vmem_to_hbm [thread:$0]  %s1135, 2048, %s8, [#allocation4], 128, 128, 8
    $region57: #{tpu_custom_call.1} parent=1 // pred_fallthru
      _
    // Predicated region
    $region58: #{tpu_custom_call.1} parent=1 // pred_check
      _
    $region59: #{tpu_custom_call.1} parent=1 // pred_check_branch
      %1142 = sbr.rel (0) target = $region61
    $region60: #{tpu_custom_call.1} parent=1 // pred_region
      %s1144 = ssub.s32 2048, 2048
      %1145 = vsyncadd [#allocation13], %s1144
      %s1146 = sshll.u32 [#allocation12], 4
      %s1147 = int_to_ptr.vmem [resolvable:$true] %s1146
      %1152 = dma.vmem_to_hbm [thread:$0]  %s1147, 2048, %s9, [#allocation13], 128, 128, 8
    $region61: #{tpu_custom_call.1} parent=1 // pred_fallthru
      _
    // Predicated region
    $region62: #{tpu_custom_call.1} parent=1 // pred_check
      _
    $region63: #{tpu_custom_call.1} parent=1 // pred_check_branch
      %1154 = sbr.rel (0) target = $region65
    $region64: #{tpu_custom_call.1} parent=1 // pred_region
      %1155 = dma.done [#allocation4], 2048
    $region65: #{tpu_custom_call.1} parent=1 // pred_fallthru
      _
    // Predicated region
    $region66: #{tpu_custom_call.1} parent=1 // pred_check
      _
    $region67: #{tpu_custom_call.1} parent=1 // pred_check_branch
      %1157 = sbr.rel (0) target = $region69
    $region68: #{tpu_custom_call.1} parent=1 // pred_region
      %1158 = dma.done [#allocation13], 2048
    $region69: #{tpu_custom_call.1} parent=1 // pred_fallthru
      _
    %1159 = vsyncpa [#allocation3], 1
    %1160 = vsyncpa [#allocation6], 1
    %1161 = vsyncpa [#allocation9], 1
    %1162 = vsyncpa [#allocation4], 1
    %1163 = vsyncpa [#allocation13], 1

</llo_original>
